<compile_context>
chip_gen: v5e
topology: v5e:2x2
jax: 0.10.0
libtpu: 0.0.40
codegen_flags: <defaults>
</compile_context>

<pallas_src>
import functools
import math

import jax
import jax.numpy as jnp
from jax.experimental import pallas as pl
from jax.experimental.pallas import tpu as pltpu


def _round_up(x, m):
    return ((x + m - 1) // m) * m


def _sim_max_loss_kernel(xn_ref, out_ref, sim_ref, *, alpha, n_valid, tm):
    i = pl.program_id(0)
    n_pad = xn_ref.shape[0]

    # Rows are already L2-normalized in the wrapper (hoisted out of the grid).
    xn_all = xn_ref[...]                                     # [N_pad, C]
    row0 = pl.multiple_of(i * tm, 8)
    qn = xn_ref[pl.ds(row0, tm), :]                          # [TM, C]

    # Transposed cosine-sim slab on the MXU: sim[j, q] = <xn[j], xn[row0+q]>.
    # Keys live on the sublane axis, the block's queries on the lane axis, so
    # the rank loop below reads "column k" with a cheap sublane slice.
    sim = jax.lax.dot_general(xn_all, qn, (((1,), (1,)), ((), ())),
                              preferred_element_type=jnp.float32)  # [N_pad,TM]
    sim = jnp.clip(sim, 0.0005, 0.9995)
    sim_ref[...] = sim

    key_idx = jax.lax.broadcasted_iota(jnp.int32, (n_pad, 1), 0)   # [N_pad,1]

    # count[j, q] = #{k : sim[q,k] > sim[q,j]}
    #             + #{k < j : sim[q,k] == sim[q,j]}   (stable tie-break)
    def body(k, cnt):
        s_k = sim_ref[pl.ds(k, 1), :]                      # [1, TM] column k
        gt = s_k > sim
        tie = jnp.logical_and(s_k == sim, key_idx > k)
        return cnt + jnp.where(jnp.logical_or(gt, tie), 1, 0)

    count = jax.lax.fori_loop(0, n_valid, body,
                              jnp.zeros((n_pad, tm), jnp.int32),
                              unroll=min(8, n_valid))

    # rank = count - 1; exp(-(count-1)*alpha) = exp(alpha) * exp(-count*alpha)
    # -> the exp(alpha) factor is applied once in the wrapper.
    weights = jnp.exp(count.astype(jnp.float32) * (-alpha))

    # Validity masks built after the loop so they are not live across it.
    q_idx = row0 + jax.lax.broadcasted_iota(jnp.int32, (1, tm), 1)  # [1, TM]
    valid = jnp.logical_and(key_idx < n_valid, q_idx < n_valid)
    # loss = -log(sim); the clamp guarantees positivity (old guard removed).
    loss = jnp.where(valid, -jnp.log(sim), 0.0)

    out_ref[...] = jnp.full((1, 1, 1), jnp.sum(loss * weights), jnp.float32)


def _vmem_estimate(n_pad, c, tm):
    # resident xn (double buffered) + sim scratch + ~8 live [N_pad, TM] slabs.
    return 2 * n_pad * c * 4 + 9 * n_pad * tm * 4 + (2 << 20)


def sim_max_loss(embedded_bg, alpha=0.25, reduction="mean", block_rows=None):
    """Pallas implementation of SimMaxLoss(metric='cos').forward(embedded_bg)."""
    N, C = embedded_bg.shape

    # --- hoisted F.normalize(x, dim=1): x / max(||x||_2, 1e-12) ------------
    x = embedded_bg.astype(jnp.float32)
    norms = jnp.sqrt(jnp.sum(x * x, axis=1, keepdims=True))
    xn = x / jnp.maximum(norms, 1e-12)

    # --- tile / VMEM-budget selection (generation aware) -------------------
    try:
        phys_vmem = int(pltpu.get_tpu_info().vmem_capacity_bytes)
    except Exception:
        phys_vmem = 64 << 20  # conservative (v7x-sized) fallback
    vmem_cap = min(phys_vmem - (8 << 20), 100 << 20)
    default_tm = 256 if phys_vmem >= (100 << 20) else 128

    if block_rows is None:
        tm = default_tm if N > default_tm else _round_up(N, 8)
    else:
        tm = _round_up(min(block_rows, N), 8)
    while tm > 8 and _vmem_estimate(_round_up(N, tm), C, tm) > vmem_cap:
        tm = max(8, _round_up(tm // 2, 8))

    n_pad = _round_up(N, tm)
    num_blocks = n_pad // tm
    if n_pad != N:
        xn = jnp.pad(xn, ((0, n_pad - N), (0, 0)))

    vmem_limit = int(min(max(_vmem_estimate(n_pad, C, tm), 8 << 20), vmem_cap))

    kernel = functools.partial(_sim_max_loss_kernel, alpha=float(alpha),
                               n_valid=N, tm=tm)

    partials = pl.pallas_call(
        kernel,
        out_shape=jax.ShapeDtypeStruct((num_blocks, 1, 1), jnp.float32),
        grid=(num_blocks,),
        in_specs=[pl.BlockSpec((n_pad, C), lambda i: (0, 0))],
        out_specs=pl.BlockSpec((1, 1, 1), lambda i: (i, 0, 0)),
        scratch_shapes=[pltpu.VMEM((n_pad, tm), jnp.float32)],
        compiler_params=pltpu.CompilerParams(
            dimension_semantics=("parallel",),
            vmem_limit_bytes=vmem_limit),
    )(xn)

    total = jnp.sum(partials) * math.exp(alpha)
    if reduction == "mean":
        return total / float(N * N)
    elif reduction == "sum":
        return total
    raise NotImplementedError(reduction)


def _reference_sim_max_loss(x, alpha=0.25, reduction="mean"):
    """Pure-JAX reference (mirrors the PyTorch module with a stable sort)."""
    xn = x / jnp.maximum(jnp.linalg.norm(x, axis=1, keepdims=True), 1e-12)
    sim = jnp.clip(xn @ xn.T, 0.0005, 0.9995)
    loss = jnp.where(-jnp.log(sim) < 0.0, 0.0, -jnp.log(sim))
    indices = jnp.argsort(-sim, axis=1)          # descending, stable
    rank = jnp.argsort(indices, axis=1) - 1
    w = jnp.exp(-rank.astype(jnp.float32) * alpha)
    wl = loss * w
    return jnp.mean(wl) if reduction == "mean" else jnp.sum(wl)


if __name__ == "__main__":
    key = jax.random.PRNGKey(0)
    k1, k2 = jax.random.split(key)

    # Case 1: single row-block (N=8, C=32) — matches the module's toy usage.
    x1 = jax.random.normal(k1, (8, 32), dtype=jnp.float32)
    out1 = jax.block_until_ready(sim_max_loss(x1, alpha=0.25))
    ref1 = _reference_sim_max_loss(x1, alpha=0.25)
    assert jnp.allclose(out1, ref1, rtol=1e-4, atol=1e-5), (out1, ref1)

    # Case 2: multi-block parallel grid with row padding (N=20 -> 24, TM=8).
    x2 = jax.random.normal(k2, (20, 32), dtype=jnp.float32)
    out2 = jax.block_until_ready(sim_max_loss(x2, alpha=0.25, block_rows=8))
    ref2 = _reference_sim_max_loss(x2, alpha=0.25)
    assert jnp.allclose(out2, ref2, rtol=1e-4, atol=1e-5), (out2, ref2)

    print("KERNEL_OK")
</pallas_src>

<mosaic_0001>
module attributes {stable_mosaic.version = 11 : i64} {
  func.func @_sim_max_loss_kernel(%arg0: i32, %arg1: memref<8x32xf32, #tpu.memory_space<vmem>>, %arg2: memref<1x1x1xf32, #tpu.memory_space<vmem>>, %arg3: memref<8x8xf32, #tpu.memory_space<vmem>>) attributes {dimension_semantics = [#tpu.dimension_semantics<parallel>], iteration_bounds = array<i64: 1>, scalar_prefetch = 0 : i64, scratch_operands = 1 : i64, tpu.core_type = #tpu.core_type<tc>, window_params = [{pipeline_mode = #tpu.pipeline_mode<synchronous>, transform_indices = @transform_0, window_bounds = array<i64: 8, 32>}, {transform_indices = @transform_1, window_bounds = array<i64: 1, 1, 1>}]} {
    %c0 = arith.constant 0 : index
    %c0_0 = arith.constant 0 : index
    %0 = vector.load %arg1[%c0, %c0_0] : memref<8x32xf32, #tpu.memory_space<vmem>>, vector<8x32xf32>
    %c8_i32 = arith.constant 8 : i32
    %1 = arith.muli %arg0, %c8_i32 : i32
    %2 = tpu.assume_multiple %1, 8 : i32
    %3 = arith.index_cast %2 : i32 to index
    %c0_1 = arith.constant 0 : index
    %4 = vector.load %arg1[%3, %c0_1] : memref<8x32xf32, #tpu.memory_space<vmem>>, vector<8x32xf32>
    %cst = arith.constant dense<0.000000e+00> : vector<8x8xf32>
    %5 = tpu.matmul %0, %4, %cst {dimension_numbers = #tpu.dot_dimension_numbers<[1], [1], [0], [0], [0, 0, 1, 0], [], []>} : vector<8x32xf32>, vector<8x32xf32>, vector<8x8xf32> -> vector<8x8xf32>
    %cst_2 = arith.constant 5.000000e-04 : f32
    %cst_3 = arith.constant 0.999499976 : f32
    %6 = vector.broadcast %cst_2 : f32 to vector<8x8xf32>
    %7 = arith.maximumf %6, %5 : vector<8x8xf32>
    %8 = vector.broadcast %cst_3 : f32 to vector<8x8xf32>
    %9 = arith.minimumf %8, %7 : vector<8x8xf32>
    %c0_4 = arith.constant 0 : index
    %c0_5 = arith.constant 0 : index
    %10 = vector.load %arg3[%c0_4, %c0_5] : memref<8x8xf32, #tpu.memory_space<vmem>>, vector<8x8xf32>
    tpu.vector_store %arg3[%c0_4, %c0_5], %9 {strides = array<i32>} : memref<8x8xf32, #tpu.memory_space<vmem>>, vector<8x8xf32>,
    %11 = tpu.iota {dimensions = array<i32: 0>} : vector<8x1xi32>
    %c0_i32 = arith.constant 0 : i32
    %12 = vector.broadcast %c0_i32 : i32 to vector<8x8xi32>
    %c0_i32_6 = arith.constant 0 : i32
    %13 = arith.index_cast %c0_i32_6 : i32 to index
    %c0_7 = arith.constant 0 : index
    %14 = vector.load %arg3[%13, %c0_7] : memref<8x8xf32, #tpu.memory_space<vmem>>, vector<1x8xf32>
    %15 = vector.broadcast %14 : vector<1x8xf32> to vector<8x8xf32>
    %16 = arith.cmpf ogt, %15, %9 : vector<8x8xf32>
    %17 = vector.broadcast %14 : vector<1x8xf32> to vector<8x8xf32>
    %18 = arith.cmpf oeq, %17, %9 : vector<8x8xf32>
    %19 = vector.broadcast %c0_i32_6 : i32 to vector<8x1xi32>
    %20 = arith.cmpi sgt, %11, %19 : vector<8x1xi32>
    %21 = vector.broadcast %20 : vector<8x1xi1> to vector<8x8xi1>
    %22 = arith.andi %18, %21 : vector<8x8xi1>
    %23 = arith.ori %16, %22 : vector<8x8xi1>
    %c1_i32 = arith.constant 1 : i32
    %c0_i32_8 = arith.constant 0 : i32
    %24 = vector.broadcast %c1_i32 : i32 to vector<8x8xi32>
    %25 = vector.broadcast %c0_i32_8 : i32 to vector<8x8xi32>
    %26 = arith.select %23, %24, %25 : vector<8x8xi1>, vector<8x8xi32>
    %27 = arith.addi %12, %26 : vector<8x8xi32>
    %c1_i32_9 = arith.constant 1 : i32
    %28 = arith.index_cast %c1_i32_9 : i32 to index
    %c0_10 = arith.constant 0 : index
    %29 = vector.load %arg3[%28, %c0_10] : memref<8x8xf32, #tpu.memory_space<vmem>>, vector<1x8xf32>
    %30 = vector.broadcast %29 : vector<1x8xf32> to vector<8x8xf32>
    %31 = arith.cmpf ogt, %30, %9 : vector<8x8xf32>
    %32 = vector.broadcast %29 : vector<1x8xf32> to vector<8x8xf32>
    %33 = arith.cmpf oeq, %32, %9 : vector<8x8xf32>
    %34 = vector.broadcast %c1_i32_9 : i32 to vector<8x1xi32>
    %35 = arith.cmpi sgt, %11, %34 : vector<8x1xi32>
    %36 = vector.broadcast %35 : vector<8x1xi1> to vector<8x8xi1>
    %37 = arith.andi %33, %36 : vector<8x8xi1>
    %38 = arith.ori %31, %37 : vector<8x8xi1>
    %c1_i32_11 = arith.constant 1 : i32
    %c0_i32_12 = arith.constant 0 : i32
    %39 = vector.broadcast %c1_i32_11 : i32 to vector<8x8xi32>
    %40 = vector.broadcast %c0_i32_12 : i32 to vector<8x8xi32>
    %41 = arith.select %38, %39, %40 : vector<8x8xi1>, vector<8x8xi32>
    %42 = arith.addi %27, %41 : vector<8x8xi32>
    %c2_i32 = arith.constant 2 : i32
    %43 = arith.index_cast %c2_i32 : i32 to index
    %c0_13 = arith.constant 0 : index
    %44 = vector.load %arg3[%43, %c0_13] : memref<8x8xf32, #tpu.memory_space<vmem>>, vector<1x8xf32>
    %45 = vector.broadcast %44 : vector<1x8xf32> to vector<8x8xf32>
    %46 = arith.cmpf ogt, %45, %9 : vector<8x8xf32>
    %47 = vector.broadcast %44 : vector<1x8xf32> to vector<8x8xf32>
    %48 = arith.cmpf oeq, %47, %9 : vector<8x8xf32>
    %49 = vector.broadcast %c2_i32 : i32 to vector<8x1xi32>
    %50 = arith.cmpi sgt, %11, %49 : vector<8x1xi32>
    %51 = vector.broadcast %50 : vector<8x1xi1> to vector<8x8xi1>
    %52 = arith.andi %48, %51 : vector<8x8xi1>
    %53 = arith.ori %46, %52 : vector<8x8xi1>
    %c1_i32_14 = arith.constant 1 : i32
    %c0_i32_15 = arith.constant 0 : i32
    %54 = vector.broadcast %c1_i32_14 : i32 to vector<8x8xi32>
    %55 = vector.broadcast %c0_i32_15 : i32 to vector<8x8xi32>
    %56 = arith.select %53, %54, %55 : vector<8x8xi1>, vector<8x8xi32>
    %57 = arith.addi %42, %56 : vector<8x8xi32>
    %c3_i32 = arith.constant 3 : i32
    %58 = arith.index_cast %c3_i32 : i32 to index
    %c0_16 = arith.constant 0 : index
    %59 = vector.load %arg3[%58, %c0_16] : memref<8x8xf32, #tpu.memory_space<vmem>>, vector<1x8xf32>
    %60 = vector.broadcast %59 : vector<1x8xf32> to vector<8x8xf32>
    %61 = arith.cmpf ogt, %60, %9 : vector<8x8xf32>
    %62 = vector.broadcast %59 : vector<1x8xf32> to vector<8x8xf32>
    %63 = arith.cmpf oeq, %62, %9 : vector<8x8xf32>
    %64 = vector.broadcast %c3_i32 : i32 to vector<8x1xi32>
    %65 = arith.cmpi sgt, %11, %64 : vector<8x1xi32>
    %66 = vector.broadcast %65 : vector<8x1xi1> to vector<8x8xi1>
    %67 = arith.andi %63, %66 : vector<8x8xi1>
    %68 = arith.ori %61, %67 : vector<8x8xi1>
    %c1_i32_17 = arith.constant 1 : i32
    %c0_i32_18 = arith.constant 0 : i32
    %69 = vector.broadcast %c1_i32_17 : i32 to vector<8x8xi32>
    %70 = vector.broadcast %c0_i32_18 : i32 to vector<8x8xi32>
    %71 = arith.select %68, %69, %70 : vector<8x8xi1>, vector<8x8xi32>
    %72 = arith.addi %57, %71 : vector<8x8xi32>
    %c4_i32 = arith.constant 4 : i32
    %73 = arith.index_cast %c4_i32 : i32 to index
    %c0_19 = arith.constant 0 : index
    %74 = vector.load %arg3[%73, %c0_19] : memref<8x8xf32, #tpu.memory_space<vmem>>, vector<1x8xf32>
    %75 = vector.broadcast %74 : vector<1x8xf32> to vector<8x8xf32>
    %76 = arith.cmpf ogt, %75, %9 : vector<8x8xf32>
    %77 = vector.broadcast %74 : vector<1x8xf32> to vector<8x8xf32>
    %78 = arith.cmpf oeq, %77, %9 : vector<8x8xf32>
    %79 = vector.broadcast %c4_i32 : i32 to vector<8x1xi32>
    %80 = arith.cmpi sgt, %11, %79 : vector<8x1xi32>
    %81 = vector.broadcast %80 : vector<8x1xi1> to vector<8x8xi1>
    %82 = arith.andi %78, %81 : vector<8x8xi1>
    %83 = arith.ori %76, %82 : vector<8x8xi1>
    %c1_i32_20 = arith.constant 1 : i32
    %c0_i32_21 = arith.constant 0 : i32
    %84 = vector.broadcast %c1_i32_20 : i32 to vector<8x8xi32>
    %85 = vector.broadcast %c0_i32_21 : i32 to vector<8x8xi32>
    %86 = arith.select %83, %84, %85 : vector<8x8xi1>, vector<8x8xi32>
    %87 = arith.addi %72, %86 : vector<8x8xi32>
    %c5_i32 = arith.constant 5 : i32
    %88 = arith.index_cast %c5_i32 : i32 to index
    %c0_22 = arith.constant 0 : index
    %89 = vector.load %arg3[%88, %c0_22] : memref<8x8xf32, #tpu.memory_space<vmem>>, vector<1x8xf32>
    %90 = vector.broadcast %89 : vector<1x8xf32> to vector<8x8xf32>
    %91 = arith.cmpf ogt, %90, %9 : vector<8x8xf32>
    %92 = vector.broadcast %89 : vector<1x8xf32> to vector<8x8xf32>
    %93 = arith.cmpf oeq, %92, %9 : vector<8x8xf32>
    %94 = vector.broadcast %c5_i32 : i32 to vector<8x1xi32>
    %95 = arith.cmpi sgt, %11, %94 : vector<8x1xi32>
    %96 = vector.broadcast %95 : vector<8x1xi1> to vector<8x8xi1>
    %97 = arith.andi %93, %96 : vector<8x8xi1>
    %98 = arith.ori %91, %97 : vector<8x8xi1>
    %c1_i32_23 = arith.constant 1 : i32
    %c0_i32_24 = arith.constant 0 : i32
    %99 = vector.broadcast %c1_i32_23 : i32 to vector<8x8xi32>
    %100 = vector.broadcast %c0_i32_24 : i32 to vector<8x8xi32>
    %101 = arith.select %98, %99, %100 : vector<8x8xi1>, vector<8x8xi32>
    %102 = arith.addi %87, %101 : vector<8x8xi32>
    %c6_i32 = arith.constant 6 : i32
    %103 = arith.index_cast %c6_i32 : i32 to index
    %c0_25 = arith.constant 0 : index
    %104 = vector.load %arg3[%103, %c0_25] : memref<8x8xf32, #tpu.memory_space<vmem>>, vector<1x8xf32>
    %105 = vector.broadcast %104 : vector<1x8xf32> to vector<8x8xf32>
    %106 = arith.cmpf ogt, %105, %9 : vector<8x8xf32>
    %107 = vector.broadcast %104 : vector<1x8xf32> to vector<8x8xf32>
    %108 = arith.cmpf oeq, %107, %9 : vector<8x8xf32>
    %109 = vector.broadcast %c6_i32 : i32 to vector<8x1xi32>
    %110 = arith.cmpi sgt, %11, %109 : vector<8x1xi32>
    %111 = vector.broadcast %110 : vector<8x1xi1> to vector<8x8xi1>
    %112 = arith.andi %108, %111 : vector<8x8xi1>
    %113 = arith.ori %106, %112 : vector<8x8xi1>
    %c1_i32_26 = arith.constant 1 : i32
    %c0_i32_27 = arith.constant 0 : i32
    %114 = vector.broadcast %c1_i32_26 : i32 to vector<8x8xi32>
    %115 = vector.broadcast %c0_i32_27 : i32 to vector<8x8xi32>
    %116 = arith.select %113, %114, %115 : vector<8x8xi1>, vector<8x8xi32>
    %117 = arith.addi %102, %116 : vector<8x8xi32>
    %c7_i32 = arith.constant 7 : i32
    %118 = arith.index_cast %c7_i32 : i32 to index
    %c0_28 = arith.constant 0 : index
    %119 = vector.load %arg3[%118, %c0_28] : memref<8x8xf32, #tpu.memory_space<vmem>>, vector<1x8xf32>
    %120 = vector.broadcast %119 : vector<1x8xf32> to vector<8x8xf32>
    %121 = arith.cmpf ogt, %120, %9 : vector<8x8xf32>
    %122 = vector.broadcast %119 : vector<1x8xf32> to vector<8x8xf32>
    %123 = arith.cmpf oeq, %122, %9 : vector<8x8xf32>
    %124 = vector.broadcast %c7_i32 : i32 to vector<8x1xi32>
    %125 = arith.cmpi sgt, %11, %124 : vector<8x1xi32>
    %126 = vector.broadcast %125 : vector<8x1xi1> to vector<8x8xi1>
    %127 = arith.andi %123, %126 : vector<8x8xi1>
    %128 = arith.ori %121, %127 : vector<8x8xi1>
    %c1_i32_29 = arith.constant 1 : i32
    %c0_i32_30 = arith.constant 0 : i32
    %129 = vector.broadcast %c1_i32_29 : i32 to vector<8x8xi32>
    %130 = vector.broadcast %c0_i32_30 : i32 to vector<8x8xi32>
    %131 = arith.select %128, %129, %130 : vector<8x8xi1>, vector<8x8xi32>
    %132 = arith.addi %117, %131 : vector<8x8xi32>
    %c8_i32_31 = arith.constant 8 : i32
    %133 = arith.sitofp %132 : vector<8x8xi32> to vector<8x8xf32>
    %cst_32 = arith.constant -2.500000e-01 : f32
    %134 = vector.broadcast %cst_32 : f32 to vector<8x8xf32>
    %135 = arith.mulf %133, %134 : vector<8x8xf32>
    %136 = math.exp %135 : vector<8x8xf32>
    %137 = tpu.iota {dimensions = array<i32: 1>} : vector<1x8xi32>
    %138 = vector.broadcast %2 : i32 to vector<1x8xi32>
    %139 = arith.addi %138, %137 : vector<1x8xi32>
    %c8_i32_33 = arith.constant 8 : i32
    %140 = vector.broadcast %c8_i32_33 : i32 to vector<8x1xi32>
    %141 = arith.cmpi slt, %11, %140 : vector<8x1xi32>
    %c8_i32_34 = arith.constant 8 : i32
    %142 = vector.broadcast %c8_i32_34 : i32 to vector<1x8xi32>
    %143 = arith.cmpi slt, %139, %142 : vector<1x8xi32>
    %144 = vector.broadcast %141 : vector<8x1xi1> to vector<8x8xi1>
    %145 = vector.broadcast %143 : vector<1x8xi1> to vector<8x8xi1>
    %146 = arith.andi %144, %145 : vector<8x8xi1>
    %147 = math.log %9 : vector<8x8xf32>
    %cst_35 = arith.constant 0.000000e+00 : f32
    %148 = vector.broadcast %cst_35 : f32 to vector<8x8xf32>
    %149 = arith.subf %148, %147 : vector<8x8xf32>
    %cst_36 = arith.constant 0.000000e+00 : f32
    %150 = vector.broadcast %cst_36 : f32 to vector<8x8xf32>
    %151 = arith.select %146, %149, %150 : vector<8x8xi1>, vector<8x8xf32>
    %152 = arith.mulf %151, %136 : vector<8x8xf32>
    %153 = vector.shape_cast %152 : vector<8x8xf32> to vector<1x8x8xf32>
    %cst_37 = arith.constant dense<0.000000e+00> : vector<1xf32>
    %154 = vector.multi_reduction <add>, %153, %cst_37 [1, 2] : vector<1x8x8xf32> to vector<1xf32>
    %155 = vector.shape_cast %154 : vector<1xf32> to vector<1x1x1xf32>
    %156 = vector.extract %155[0, 0, 0] : f32 from vector<1x1x1xf32>
    %157 = vector.broadcast %156 : f32 to vector<1x1x1xf32>
    %c0_38 = arith.constant 0 : index
    %c0_39 = arith.constant 0 : index
    %c0_40 = arith.constant 0 : index
    %158 = vector.load %arg2[%c0_38, %c0_39, %c0_40] : memref<1x1x1xf32, #tpu.memory_space<vmem>>, vector<1x1x1xf32>
    tpu.vector_store %arg2[%c0_38, %c0_39, %c0_40], %157 {strides = array<i32>} : memref<1x1x1xf32, #tpu.memory_space<vmem>>, vector<1x1x1xf32>,
    return
  }
  func.func @transform_0(%arg0: i32) -> (i32, i32) {
    %c0_i32 = arith.constant 0 : i32
    %c0_i32_0 = arith.constant 0 : i32
    %c0_i32_1 = arith.constant 0 : i32
    return %c0_i32, %c0_i32_0 : i32, i32
  }
  func.func @transform_1(%arg0: i32) -> (i32, i32, i32) {
    %c0_i32 = arith.constant 0 : i32
    %c0_i32_0 = arith.constant 0 : i32
    %c0_i32_1 = arith.constant 0 : i32
    return %arg0, %c0_i32, %c0_i32_0 : i32, i32, i32
  }
}

</mosaic_0001>

<llo_original>
// kernel: tpu_custom_call.1
$region0: #{tpu_custom_call.1}
  #allocation0 [shape = 'u32[]', space=smem, size = 0x4, offset = 0x4, fixed_abs, tag = 'smem constant byte address 0x4 - core index']
  #allocation1 [shape = 'u32[72,128]{1,0:T(1,128)}', space=vmem, size = 0x9000, scoped, tag = 'internal scratch']
  #allocation2 [shape = 'f32[8,8]{1,0:T(8,128)}', space=vmem, size = 0x1000, scoped, tag = 'scratch operand']
  %s0 = inlined_call_operand.hbm [shape: f32[8,32], index: 0, kind: input, shape index: {}]
  %s1 = inlined_call_operand.hbm [shape: f32[1,1,1], index: 1, kind: output, shape index: {}]
  %s2 = sld [smem:[#allocation0]]
  $region18: #{tpu_custom_call.1} parent=0
    _
  %s4 = ssub.s32 1, %s2
  %s5 = scalar_select 0, %s4, %s2
  $region1: #{tpu_custom_call.1} parent=0
    #allocation3 [shape = 'u8[4096]{0}', space=vmem, size = 0x1000, scoped, tag = 'input window, operand 0, single buffered']
    #allocation4 [shape = 's32[1]{0}', space=sflag, size = 0x4, scoped, tag = 'scoped memory for tpu_custom_call.1']
    #allocation5 [shape = 's32[1]{0}', space=sflag, size = 0x4, scoped, tag = 'scoped memory for tpu_custom_call.1']
    #allocation6 [shape = 'u8[512]{0}', space=vmem, size = 0x400, scoped, tag = 'output window, operand 0, single buffered']
    %6 = vsyncpa [#allocation4], 0
    %7 = vsyncpa [#allocation5], 0
    // Predicated region
    $region2: #{tpu_custom_call.1} parent=1 // pred_check
      _
    $region3: #{tpu_custom_call.1} parent=1 // pred_check_branch
      %9 = sbr.rel (0) target = $region5
    $region4: #{tpu_custom_call.1} parent=1 // pred_region
      %11 = vsyncadd [#allocation4], 0
      %s13 = sshll.u32 %s0, 4
      %s14 = int_to_ptr.hbm [resolvable:$true] %s13
      %s15 = sshll.u32 [#allocation3], 4
      %s16 = int_to_ptr.vmem [resolvable:$true] %s15
      %18 = dma.hbm_to_vmem [thread:$0]  %s14, 128, %s16, [#allocation4]
    $region5: #{tpu_custom_call.1} parent=1 // pred_fallthru
      _
    // Predicated region
    $region6: #{tpu_custom_call.1} parent=1 // pred_check
      _
    $region7: #{tpu_custom_call.1} parent=1 // pred_check_branch
      %20 = sbr.rel (0) target = $region9
    $region8: #{tpu_custom_call.1} parent=1 // pred_region
      %22 = dma.done [#allocation4], 128
    $region9: #{tpu_custom_call.1} parent=1 // pred_fallthru
      _
    %v23 = vld [vmem:[#allocation3] sm:$0xff]
    %s24 = smul.u32 0, 8
    %s25 = scalar_lea.vmem [#allocation3], %s24
    %v26 = vld [vmem:[%s25] sm:$0xff]
    %vm27 = vcmask 261120
    %v29 = vsel %vm27, %v23, 0
    %v32 = vsel %vm27, %v26, 0
    %34 = vmatpush.xpose.msra.mxu0 0.0
    %35 = vmatpush.xpose.msra.mxu0 0.0
    %36 = vmatpush.xpose.msra.mxu0 0.0
    %37 = vmatpush.xpose.msra.mxu0 0.0
    %38 = vmatpush.xpose.msra.mxu0 0.0
    %39 = vmatpush.xpose.msra.mxu0 0.0
    %40 = vmatpush.xpose.msra.mxu0 0.0
    %41 = vmatpush.xpose.msra.mxu0 0.0
    %42 = vmatpush.xpose.msra.mxu0 0.0
    %43 = vmatpush.xpose.msra.mxu0 0.0
    %44 = vmatpush.xpose.msra.mxu0 0.0
    %45 = vmatpush.xpose.msra.mxu0 0.0
    %46 = vmatpush.xpose.msra.mxu0 0.0
    %47 = vmatpush.xpose.msra.mxu0 0.0
    %48 = vmatpush.xpose.msra.mxu0 0.0
    %49 = vmatpush.xpose.msra.mxu0 %v32
    %50 = vmatmul.f32.gmra.mxu0 %v29
    %v51 = vpop.f32.mrf.mxu0
    %v52 = vadd.f32 0.0, %v51
    %53 = vdwg.mxu0
    %v54 = vmax.f32 %v52, 0.0005
    %v55 = vmin.f32 %v54, 0.9995
    %vm56 = vcmask 64512
    %57 = vst.msk [vmem:[#allocation2] sm:$0xff] %vm56, %v55
    %v58 = vlaneseq
    %v59 = vshrl.u32 %v58, 7
    %v60 = vld [vmem:[#allocation2] sm:$0x1]
    %v61 = vperm.slane %v60, 0
    %vm62 = vcmp.gt.f32.partialorder %v61, %v55
    %vm63 = vcmp.eq.f32.partialorder %v61, %v55
    %vm64 = vcmp.gt.s32.totalorder %v59, 0
    %v65 = vsel %vm64, 1, 0
    %vm66 = vcmp.eq.s32.totalorder %v65, 1
    %vm67 = vmand %vm63, %vm66
    %vm68 = vmor %vm62, %vm67
    %v69 = vsel %vm68, 1, 0
    %v70 = vld [vmem:[#allocation2 + $0x1] sm:$0x1]
    %v71 = vperm.slane %v70, 0
    %vm72 = vcmp.gt.f32.partialorder %v71, %v55
    %vm73 = vcmp.eq.f32.partialorder %v71, %v55
    %vm74 = vcmp.gt.s32.totalorder %v59, 1
    %v75 = vsel %vm74, 1, 0
    %vm76 = vcmp.eq.s32.totalorder %v75, 1
    %vm77 = vmand %vm73, %vm76
    %vm78 = vmor %vm72, %vm77
    %v79 = vsel %vm78, 1, 0
    %v80 = vadd.s32 %v69, %v79
    %v81 = vld [vmem:[#allocation2 + $0x2] sm:$0x1]
    %v82 = vperm.slane %v81, 0
    %vm83 = vcmp.gt.f32.partialorder %v82, %v55
    %vm84 = vcmp.eq.f32.partialorder %v82, %v55
    %vm85 = vcmp.gt.s32.totalorder %v59, 2
    %v86 = vsel %vm85, 1, 0
    %vm87 = vcmp.eq.s32.totalorder %v86, 1
    %vm88 = vmand %vm84, %vm87
    %vm89 = vmor %vm83, %vm88
    %v90 = vsel %vm89, 1, 0
    %v91 = vadd.s32 %v80, %v90
    %v92 = vld [vmem:[#allocation2 + $0x3] sm:$0x1]
    %v93 = vperm.slane %v92, 0
    %vm94 = vcmp.gt.f32.partialorder %v93, %v55
    %vm95 = vcmp.eq.f32.partialorder %v93, %v55
    %vm96 = vcmp.gt.s32.totalorder %v59, 3
    %v97 = vsel %vm96, 1, 0
    %vm98 = vcmp.eq.s32.totalorder %v97, 1
    %vm99 = vmand %vm95, %vm98
    %vm100 = vmor %vm94, %vm99
    %v101 = vsel %vm100, 1, 0
    %v102 = vadd.s32 %v91, %v101
    %v103 = vld [vmem:[#allocation2 + $0x4] sm:$0x1]
    %v104 = vperm.slane %v103, 0
    %vm105 = vcmp.gt.f32.partialorder %v104, %v55
    %vm106 = vcmp.eq.f32.partialorder %v104, %v55
    %vm107 = vcmp.gt.s32.totalorder %v59, 4
    %v108 = vsel %vm107, 1, 0
    %vm109 = vcmp.eq.s32.totalorder %v108, 1
    %vm110 = vmand %vm106, %vm109
    %vm111 = vmor %vm105, %vm110
    %v112 = vsel %vm111, 1, 0
    %v113 = vadd.s32 %v102, %v112
    %v114 = vld [vmem:[#allocation2 + $0x5] sm:$0x1]
    %v115 = vperm.slane %v114, 0
    %vm116 = vcmp.gt.f32.partialorder %v115, %v55
    %vm117 = vcmp.eq.f32.partialorder %v115, %v55
    %vm118 = vcmp.gt.s32.totalorder %v59, 5
    %v119 = vsel %vm118, 1, 0
    %vm120 = vcmp.eq.s32.totalorder %v119, 1
    %vm121 = vmand %vm117, %vm120
    %vm122 = vmor %vm116, %vm121
    %v123 = vsel %vm122, 1, 0
    %v124 = vadd.s32 %v113, %v123
    %v125 = vld [vmem:[#allocation2 + $0x6] sm:$0x1]
    %v126 = vperm.slane %v125, 0
    %vm127 = vcmp.gt.f32.partialorder %v126, %v55
    %vm128 = vcmp.eq.f32.partialorder %v126, %v55
    %vm129 = vcmp.gt.s32.totalorder %v59, 6
    %v130 = vsel %vm129, 1, 0
    %vm131 = vcmp.eq.s32.totalorder %v130, 1
    %vm132 = vmand %vm128, %vm131
    %vm133 = vmor %vm127, %vm132
    %v134 = vsel %vm133, 1, 0
    %v135 = vadd.s32 %v124, %v134
    %v136 = vld [vmem:[#allocation2 + $0x7] sm:$0x1]
    %v137 = vperm.slane %v136, 0
    %vm138 = vcmp.gt.f32.partialorder %v137, %v55
    %vm139 = vcmp.eq.f32.partialorder %v137, %v55
    %vm140 = vcmp.gt.s32.totalorder %v59, 7
    %v141 = vsel %vm140, 1, 0
    %vm142 = vcmp.eq.s32.totalorder %v141, 1
    %vm143 = vmand %vm139, %vm142
    %vm144 = vmor %vm138, %vm143
    %v145 = vsel %vm144, 1, 0
    %v146 = vadd.s32 %v135, %v145
    %v147 = vcvt.s32.f32 %v146
    %v148 = vmul.f32 %v147, -0.25
    %v149 = vmul.f32 %v148, 1.442695
    %v150 = vpow.pop %v149
    %v151 = vlaneseq
    %v152 = vand.u32 %v151, 127
    %v153 = vstv %s24
    %v154 = vadd.s32 %v153, %v152
    %vm155 = vcmp.lt.s32.totalorder %v59, 8
    %vm156 = vcmp.lt.s32.totalorder %v154, 8
    %v157 = vsel %vm155, 1, 0
    %vm158 = vcmp.eq.s32.totalorder %v157, 1
    %v159 = vsel %vm156, 1, 0
    %vm160 = vcmp.eq.s32.totalorder %v159, 1
    %vm161 = vmand %vm158, %vm160
    %v162 = vlog2.pop %v55
    %v163 = vmul.f32 %v162, 0.6931472
    %v164 = vsub.f32 0.0, %v163
    %v165 = vsel %vm161, %v164, 0.0
    %v166 = vmul.f32 %v165, %v150
    %v167 = vsel %vm56, %v166, 0.0
    %168 = vadd.xlane.f32.xlu0 %v167
    %v169 = vpop.xlane.xlu0 %168
    %v170 = vrot.slane %v169, 4
    %v171 = vadd.f32 %v169, %v170
    %v172 = vrot.slane %v171, 2
    %v173 = vadd.f32 %v171, %v172
    %v174 = vrot.slane %v173, 1
    %v175 = vadd.f32 %v173, %v174
    %s176 = vtos %v175
    %v177 = vstv %s176
    %vm178 = vcmask 0
    %179 = vst.msk [vmem:[#allocation6] sm:$0x1] %vm178, %v177
    // Predicated region
    $region10: #{tpu_custom_call.1} parent=1 // pred_check
      _
    $region11: #{tpu_custom_call.1} parent=1 // pred_check_branch
      %181 = sbr.rel (0) target = $region13
    $region12: #{tpu_custom_call.1} parent=1 // pred_region
      %183 = vsyncadd [#allocation5], 0
      %s185 = sshll.u32 [#allocation6], 4
      %s186 = int_to_ptr.vmem [resolvable:$true] %s185
      %s187 = sshll.u32 %s1, 4
      %s188 = int_to_ptr.hbm [resolvable:$true] %s187
      %190 = dma.vmem_to_hbm [thread:$0]  %s186, 16, %s188, [#allocation5]
    $region13: #{tpu_custom_call.1} parent=1 // pred_fallthru
      _
    // Predicated region
    $region14: #{tpu_custom_call.1} parent=1 // pred_check
      _
    $region15: #{tpu_custom_call.1} parent=1 // pred_check_branch
      %192 = sbr.rel (0) target = $region17
    $region16: #{tpu_custom_call.1} parent=1 // pred_region
      %194 = dma.done [#allocation5], 16
    $region17: #{tpu_custom_call.1} parent=1 // pred_fallthru
      _
    %195 = vsyncpa [#allocation4], 1
    %196 = vsyncpa [#allocation5], 1

</llo_original>
